<compile_context>
chip_gen: v5e
topology: v5e:2x2
jax: 0.10.0
libtpu: 0.0.40
codegen_flags: <defaults>
</compile_context>

<pallas_src>
import functools
import math

import jax
import jax.numpy as jnp
import numpy as np
from jax.experimental import pallas as pl
from jax.experimental.pallas import tpu as pltpu

# ---- ENV / AGENT constants (small, consistent with the module) ----
BIN_MAX_COUNT = 8
EMBEDDING_DIM = 32
ROW_COUNT = 16
COL_COUNT = 16
BATCH_SIZE = 2
BN_EPS = 1e-5

# (Cin, Cout, kernel, stride) for conv1 / conv2 / conv3
CONV_SPECS = ((2, 4, 5, 2), (4, 8, 3, 2), (8, 8, 2, 2))


def conv2d_size_out(size, kernel_size, stride):
    return (size - (kernel_size - 1) - 1) // stride + 1


CONV_H = [ROW_COUNT]
CONV_W = [COL_COUNT]
for _cin, _cout, _k, _s in CONV_SPECS:
    CONV_H.append(conv2d_size_out(CONV_H[-1], _k, _s))
    CONV_W.append(conv2d_size_out(CONV_W[-1], _k, _s))
# CONV_H == CONV_W == [16, 6, 2, 1]
LINEAR3_IN = CONV_H[-1] * CONV_W[-1] * 8 + EMBEDDING_DIM  # 40


# --------------------------- constant slab layouts (static, host side) ---------------------------
def _align(n, a):
    return (n + a - 1) // a * a


def _build_layout(entries, row_align):
    """entries: [(name, rows, cols)] -> ({name: (row_off, rows, cols)}, total_rows, width).
    Each entry starts on a row multiple of `row_align` so in-kernel slices are tile-aligned."""
    offs, cur, width = {}, 0, 0
    for name, rows, cols in entries:
        offs[name] = (cur, rows, cols)
        cur += _align(rows, row_align)
        width = max(width, cols)
    return offs, cur, width


# bf16 matmul-operand slab: linear weights, same-channel (0/1) matrices, stacked Toeplitz weights.
_W_ENTRIES = [
    ("w1", BIN_MAX_COUNT * 3, EMBEDDING_DIM),
    ("w2", EMBEDDING_DIM, EMBEDDING_DIM),
    ("w3a", EMBEDDING_DIM, BIN_MAX_COUNT),
    ("w3b", LINEAR3_IN - EMBEDDING_DIM, BIN_MAX_COUNT),
    ("ggt1", CONV_W[1] * CONV_SPECS[0][1], CONV_W[1] * CONV_SPECS[0][1]),
    ("ggt2", CONV_W[2] * CONV_SPECS[1][1], CONV_W[2] * CONV_SPECS[1][1]),
] + [
    ("t%d" % li, k * CONV_W[li - 1] * cin, CONV_W[li] * cout)
    for li, (cin, cout, k, _s) in enumerate(CONV_SPECS, start=1)
]
W_OFFS, W_ROWS, W_WIDTH = _build_layout(_W_ENTRIES, 16)   # 16-row alignment for bf16 tiles

# small f32 slab: the three linear biases (kept f32 for exact bias adds).
_F_ENTRIES = [
    ("b1", 1, EMBEDDING_DIM),
    ("b2", 1, EMBEDDING_DIM),
    ("b3", 1, BIN_MAX_COUNT),
]
F_OFFS, F_ROWS, F_WIDTH = _build_layout(_F_ENTRIES, 8)


def _toeplitz_pack(w, w_in, w_out, stride):
    """Pack a PyTorch-layout conv weight (Cout, Cin, kh, kw) into per-kernel-row Toeplitz
    matrices T of shape (KH, w_in*Cin, w_out*Cout) with
        T[kh, (stride*wo + kw)*Cin + ci, wo*Cout + co] = w[co, ci, kh, kw],
    so `act @ T[kh]` slides kernel row kh over the width axis when `act` columns are (w, c)."""
    w_np = np.asarray(w, dtype=np.float32)
    cout, cin, n_kh, n_kw = w_np.shape
    t = np.zeros((n_kh, w_in * cin, w_out * cout), dtype=np.float32)
    for kh in range(n_kh):
        for wo in range(w_out):
            for kw in range(n_kw):
                wi = stride * wo + kw
                t[kh, wi * cin:(wi + 1) * cin, wo * cout:(wo + 1) * cout] = w_np[:, :, kh, kw].T
    return t


def _same_channel_matrix(w_out, channels):
    """GGt[i, j] = 1 iff columns i and j hold the same channel (columns laid out as wo*C + c)."""
    idx = np.arange(w_out * channels)
    return (idx[:, None] % channels == idx[None, :] % channels).astype(np.float32)


@functools.lru_cache(maxsize=4)
def _selector_slab(batch):
    """Pack all strided row-selector matrices for this batch size into one bf16 slab.

    Block for (conv li, kernel row kh) lives at rows [base + kh*blk, base + kh*blk + rows):
        S[n*h_out + ho, n*h_in + stride*ho + kh] = 1
    Returns (slab_bf16, meta) with meta[li] = (base, blk, rows, cols)."""
    width = batch * ROW_COUNT
    meta, blocks, cur = [], [], 0
    for li, (_cin, _cout, k, s) in enumerate(CONV_SPECS):
        h_in, h_out = CONV_H[li], CONV_H[li + 1]
        rows, cols = batch * h_out, batch * h_in
        blk = _align(rows, 16)
        meta.append((cur, blk, rows, cols))
        for kh in range(k):
            b = np.zeros((blk, width), np.float32)
            for n in range(batch):
                for ho in range(h_out):
                    b[n * h_out + ho, n * h_in + s * ho + kh] = 1.0
            blocks.append(b)
        cur += k * blk
    slab = np.concatenate(blocks, axis=0)
    return jnp.asarray(slab, jnp.bfloat16), tuple(meta)


# --------------------------------------- parameters ---------------------------------------
def init_params(key):
    """Sample parameters exactly like a fresh PyTorch DQN() and pack them into the constant
    slabs consumed by the fused kernel.  Returns (params, raw): `params` holds the packed
    slabs (kernel inputs), `raw` keeps unpacked f32 tensors for the pure-JAX reference."""
    keys = jax.random.split(key, 9)

    def lin(kw, kb, fan_in, fan_out):
        bound = 1.0 / math.sqrt(fan_in)
        w = np.asarray(jax.random.uniform(kw, (fan_in, fan_out), jnp.float32, -bound, bound))
        b = np.asarray(jax.random.uniform(kb, (1, fan_out), jnp.float32, -bound, bound))
        return w, b

    def conv_w(kw, cin, cout, k):
        bound = 1.0 / math.sqrt(cin * k * k)
        return np.asarray(jax.random.uniform(kw, (cout, cin, k, k), jnp.float32, -bound, bound))

    w1, b1 = lin(keys[0], keys[1], BIN_MAX_COUNT * 3, EMBEDDING_DIM)
    w2, b2 = lin(keys[2], keys[3], EMBEDDING_DIM, EMBEDDING_DIM)
    w3, b3 = lin(keys[4], keys[5], LINEAR3_IN, BIN_MAX_COUNT)
    raw = {"w1": w1, "b1": b1, "w2": w2, "b2": b2, "w3": w3, "b3": b3}

    dense = {
        "w1": w1, "w2": w2,
        "w3a": w3[:EMBEDDING_DIM], "w3b": w3[EMBEDDING_DIM:],   # split => no concat in-kernel
        "ggt1": _same_channel_matrix(CONV_W[1], CONV_SPECS[0][1]),
        "ggt2": _same_channel_matrix(CONV_W[2], CONV_SPECS[1][1]),
    }
    # Conv weights (PyTorch OIHW layout) packed into row-stacked per-kernel-row Toeplitz
    # matrices.  Conv biases are omitted on purpose: a per-channel bias cancels exactly
    # under the train-mode BatchNorm that immediately follows each conv.
    for li, (cin, cout, k, s) in enumerate(CONV_SPECS, start=1):
        wc = conv_w(keys[5 + li], cin, cout, k)
        raw["wc%d" % li] = wc
        t = _toeplitz_pack(wc, CONV_W[li - 1], CONV_W[li], s)      # (k, w_in*cin, w_out*cout)
        dense["t%d" % li] = t.reshape(k * t.shape[1], t.shape[2])  # kh-major row stack

    wslab = np.zeros((W_ROWS, W_WIDTH), np.float32)
    for name, (off, r, c) in W_OFFS.items():
        wslab[off:off + r, :c] = dense[name]

    fslab = np.zeros((F_ROWS, F_WIDTH), np.float32)
    for name, arr in (("b1", b1), ("b2", b2), ("b3", b3)):
        off, r, c = F_OFFS[name]
        fslab[off:off + r, :c] = arr

    params = {"wslab": jnp.asarray(wslab, jnp.bfloat16),
              "fslab": jnp.asarray(fslab, jnp.float32)}
    return params, raw


# ---------------------------------------- the fused kernel ----------------------------------------
def _dqn_fused_kernel(bin_ref, pal_ref, wslab_ref, sslab_ref, fslab_ref, out_ref, *, sel_meta):
    """Entire DQN forward in one grid-less invocation; every intermediate stays in VMEM/vregs."""
    f32, bf16 = jnp.float32, jnp.bfloat16
    batch = out_ref.shape[0]

    def wsl(name):                       # static tile-aligned view into the bf16 operand slab
        off, r, c = W_OFFS[name]
        return wslab_ref[pl.ds(off, r), pl.ds(0, c)]

    def fsl(name):                       # static view into the small f32 bias slab
        off, r, c = F_OFFS[name]
        return fslab_ref[pl.ds(off, r), pl.ds(0, c)]

    def mm(a, b):                        # bf16 operands, f32 MXU accumulation
        return jnp.dot(a, b, preferred_element_type=f32)

    # ---------------- MLP branch: relu(linear2(relu(linear1(bin)))) ----------------
    x1 = jnp.maximum(mm(bin_ref[...].astype(bf16), wsl("w1")) + fsl("b1"), 0.0)
    x1 = jnp.maximum(mm(x1.astype(bf16), wsl("w2")) + fsl("b2"), 0.0)

    # ---------------- Conv branch ----------------
    # Activation layout: rows = (batch, out_row), cols = (out_col, channel).
    # conv(act) = concat_kh(S[kh] @ act) @ T_stacked:
    #   * KH independent tiny row-gather matmuls (S is 0/1, so bf16 products are exact),
    #   * one matmul against the row-stacked Toeplitz weights.
    def conv(act_bf16, li):
        base, blk, rows, cols = sel_meta[li]
        kh_count = CONV_SPECS[li][2]
        parts = [
            mm(sslab_ref[pl.ds(base + kh * blk, rows), pl.ds(0, cols)], act_bf16)
            for kh in range(kh_count)
        ]
        p_cat = jnp.concatenate(parts, axis=1).astype(bf16)
        return mm(p_cat, wsl("t%d" % (li + 1)))

    def same_channel_sums(v, ggt_bf16):
        # v @ GGt at ~f32 accuracy using plain bf16 MXU passes: split v into an exactly
        # representable bf16 "hi" part plus a tiny "lo" remainder (GGt is 0/1 so every
        # product is exact) -> the BN statistics stay effectively f32.
        v_hi = v.astype(bf16)
        v_lo = (v - v_hi.astype(f32)).astype(bf16)
        return mm(v_hi, ggt_bf16) + mm(v_lo, ggt_bf16)

    def bn_relu(y, ggt_bf16, n_per_channel):
        # Train-mode BatchNorm2d (biased variance, eps=1e-5); the identity affine
        # (gamma=1, beta=0 of a fresh module) is folded away.  E[y] and E[y^2] come from
        # two *independent* same-channel column-sum matmuls (E[y^2]-E[y]^2 form).
        inv_n = 1.0 / n_per_channel
        s1 = same_channel_sums(y, ggt_bf16)
        s2 = same_channel_sums(y * y, ggt_bf16)
        m = jnp.sum(s1, axis=0, keepdims=True) * inv_n
        m2 = jnp.sum(s2, axis=0, keepdims=True) * inv_n
        var = jnp.maximum(m2 - m * m, 0.0)
        return jnp.maximum((y - m) * jax.lax.rsqrt(var + BN_EPS), 0.0)

    h = pal_ref[...].astype(bf16)                                        # (B*16, 16*2)
    h = bn_relu(conv(h, 0), wsl("ggt1"), batch * CONV_H[1] * CONV_W[1])
    h = bn_relu(conv(h.astype(bf16), 1), wsl("ggt2"), batch * CONV_H[2] * CONV_W[2])
    y3 = conv(h.astype(bf16), 2)                                         # (B, 8): 1x1 spatial
    m3 = jnp.mean(y3, axis=0, keepdims=True)                             # BN3: per-column stats
    c3 = y3 - m3
    v3 = jnp.mean(c3 * c3, axis=0, keepdims=True)
    x2 = jnp.maximum(c3 * jax.lax.rsqrt(v3 + BN_EPS), 0.0)

    # ------- Head: linear3(concat([x1, x2])) as two partial matmuls (no concat materialized) -------
    out_ref[...] = (mm(x1.astype(bf16), wsl("w3a"))
                    + mm(x2.astype(bf16), wsl("w3b"))
                    + fsl("b3"))


# ---------------------------------------- forward wrapper ----------------------------------------
def dqn_forward(params, bin_info, pallet_info):
    # Mirror the PyTorch reshape branches (batched 3-D bin_info / single-sample paths).
    if bin_info.ndim != 3:
        x = bin_info.reshape(1, -1)
    else:
        x = bin_info.reshape(bin_info.shape[0], -1)
    if pallet_info.ndim != 4:
        pallet_info = pallet_info[None]
    batch = pallet_info.shape[0]

    # NHWC -> (B*H, W*C): a free row-major reshape.  The NCHW permute of the PyTorch forward
    # is folded into the Toeplitz weight packing instead of moving data.
    pal = pallet_info.reshape(batch * ROW_COUNT, COL_COUNT * 2)
    sslab, sel_meta = _selector_slab(batch)

    kernel = functools.partial(_dqn_fused_kernel, sel_meta=sel_meta)
    args = (x, pal, params["wslab"], sslab, params["fslab"])
    return pl.pallas_call(
        kernel,
        out_shape=jax.ShapeDtypeStruct((batch, BIN_MAX_COUNT), jnp.float32),
        # Single grid-less invocation: every operand is whole-array VMEM resident and only
        # 5 DMA descriptors are issued (bin, pallet, 3 packed constant slabs).
        in_specs=[pl.BlockSpec(memory_space=pltpu.VMEM) for _ in args],
        out_specs=pl.BlockSpec(memory_space=pltpu.VMEM),
    )(*args)


# ------------------------- pure-JAX reference (spec check, same precision) -------------------------
def _reference_forward(raw, bin_info, pallet_info):
    """Mirror of DQN.forward (train-mode BN, biased variance, eps=1e-5) with the same
    bf16-operand / f32-accumulate matmul precision as the kernel."""
    f32, bf16 = jnp.float32, jnp.bfloat16

    def dot(a, b):
        return jnp.dot(a.astype(bf16), jnp.asarray(b, bf16), preferred_element_type=f32)

    if bin_info.ndim != 3:
        x = bin_info.reshape(1, -1)
    else:
        x = bin_info.reshape(bin_info.shape[0], -1)
    p = pallet_info if pallet_info.ndim == 4 else pallet_info[None]
    p = jnp.transpose(p, (0, 3, 1, 2))                               # NHWC -> NCHW

    x1 = jnp.maximum(dot(x, raw["w1"]) + raw["b1"], 0.0)
    x1 = jnp.maximum(dot(x1, raw["w2"]) + raw["b2"], 0.0)

    def conv_bn_relu(h, wc, stride):
        y = jax.lax.conv_general_dilated(
            h.astype(bf16), jnp.asarray(wc, bf16), (stride, stride), "VALID",
            dimension_numbers=("NCHW", "OIHW", "NCHW"),
            preferred_element_type=f32)
        mean = jnp.mean(y, axis=(0, 2, 3), keepdims=True)
        var = jnp.mean((y - mean) ** 2, axis=(0, 2, 3), keepdims=True)
        return jnp.maximum((y - mean) * jax.lax.rsqrt(var + BN_EPS), 0.0)

    h = conv_bn_relu(p, raw["wc1"], 2)
    h = conv_bn_relu(h, raw["wc2"], 2)
    h = conv_bn_relu(h, raw["wc3"], 2)
    x2 = h.reshape(h.shape[0], -1)
    feat = jnp.concatenate([x1, x2], axis=1)
    return dot(feat, raw["w3"]) + raw["b3"]


if __name__ == "__main__":
    key = jax.random.PRNGKey(0)
    kp, kb, ki = jax.random.split(key, 3)
    params, raw = init_params(kp)

    bin_info = jax.random.normal(kb, (BATCH_SIZE, BIN_MAX_COUNT, 3), jnp.float32)
    pallet_info = jax.random.normal(ki, (BATCH_SIZE, ROW_COUNT, COL_COUNT, 2), jnp.float32)

    out = jax.jit(dqn_forward)(params, bin_info, pallet_info)
    out = jax.block_until_ready(out)
    assert out.shape == (BATCH_SIZE, BIN_MAX_COUNT), out.shape
    assert out.dtype == jnp.float32
    assert bool(jnp.all(jnp.isfinite(out)))

    # Sanity-check against the precision-matched pure-JAX reference of the PyTorch forward.
    ref = _reference_forward(raw, bin_info, pallet_info)
    max_err = float(jnp.max(jnp.abs(out - ref)))
    assert max_err < 2e-2, "kernel deviates from reference: max_err=%g" % max_err
    print("KERNEL_OK")
</pallas_src>

<mosaic_0001>
module attributes {stable_mosaic.version = 11 : i64} {
  func.func @_dqn_fused_kernel(%arg0: memref<2x24xf32, #tpu.memory_space<vmem>>, %arg1: memref<32x32xf32, #tpu.memory_space<vmem>>, %arg2: memref<432x32xbf16, #tpu.memory_space<vmem>>, %arg3: memref<160x32xbf16, #tpu.memory_space<vmem>>, %arg4: memref<24x32xf32, #tpu.memory_space<vmem>>, %arg5: memref<2x8xf32, #tpu.memory_space<vmem>>) attributes {dimension_semantics = [], scalar_prefetch = 0 : i64, scratch_operands = 0 : i64, tpu.core_type = #tpu.core_type<tc>} {
    %c0 = arith.constant 0 : index
    %c0_0 = arith.constant 0 : index
    %0 = vector.load %arg0[%c0, %c0_0] : memref<2x24xf32, #tpu.memory_space<vmem>>, vector<2x24xf32>
    %1 = arith.truncf %0 : vector<2x24xf32> to vector<2x24xbf16>
    %c0_1 = arith.constant 0 : index
    %c0_2 = arith.constant 0 : index
    %2 = vector.load %arg2[%c0_1, %c0_2] : memref<432x32xbf16, #tpu.memory_space<vmem>>, vector<24x32xbf16>
    %cst = arith.constant dense<0.000000e+00> : vector<2x32xf32>
    %3 = tpu.matmul %1, %2, %cst {dimension_numbers = #tpu.dot_dimension_numbers<[1], [0], [0], [1], [0, 0, 1, 1], [], []>} : vector<2x24xbf16>, vector<24x32xbf16>, vector<2x32xf32> -> vector<2x32xf32>
    %c0_3 = arith.constant 0 : index
    %c0_4 = arith.constant 0 : index
    %4 = vector.load %arg4[%c0_3, %c0_4] : memref<24x32xf32, #tpu.memory_space<vmem>>, vector<1x32xf32>
    %5 = vector.broadcast %4 : vector<1x32xf32> to vector<2x32xf32>
    %6 = arith.addf %3, %5 : vector<2x32xf32>
    %cst_5 = arith.constant 0.000000e+00 : f32
    %7 = vector.broadcast %cst_5 : f32 to vector<2x32xf32>
    %8 = arith.maximumf %6, %7 : vector<2x32xf32>
    %9 = arith.truncf %8 : vector<2x32xf32> to vector<2x32xbf16>
    %c32 = arith.constant 32 : index
    %c0_6 = arith.constant 0 : index
    %10 = vector.load %arg2[%c32, %c0_6] : memref<432x32xbf16, #tpu.memory_space<vmem>>, vector<32x32xbf16>
    %cst_7 = arith.constant dense<0.000000e+00> : vector<2x32xf32>
    %11 = tpu.matmul %9, %10, %cst_7 {dimension_numbers = #tpu.dot_dimension_numbers<[1], [0], [0], [1], [0, 0, 1, 1], [], []>} : vector<2x32xbf16>, vector<32x32xbf16>, vector<2x32xf32> -> vector<2x32xf32>
    %c8 = arith.constant 8 : index
    %c0_8 = arith.constant 0 : index
    %12 = vector.load %arg4[%c8, %c0_8] : memref<24x32xf32, #tpu.memory_space<vmem>>, vector<1x32xf32>
    %13 = vector.broadcast %12 : vector<1x32xf32> to vector<2x32xf32>
    %14 = arith.addf %11, %13 : vector<2x32xf32>
    %cst_9 = arith.constant 0.000000e+00 : f32
    %15 = vector.broadcast %cst_9 : f32 to vector<2x32xf32>
    %16 = arith.maximumf %14, %15 : vector<2x32xf32>
    %c0_10 = arith.constant 0 : index
    %c0_11 = arith.constant 0 : index
    %17 = vector.load %arg1[%c0_10, %c0_11] : memref<32x32xf32, #tpu.memory_space<vmem>>, vector<32x32xf32>
    %18 = arith.truncf %17 : vector<32x32xf32> to vector<32x32xbf16>
    %c0_12 = arith.constant 0 : index
    %c0_13 = arith.constant 0 : index
    %19 = vector.load %arg3[%c0_12, %c0_13] : memref<160x32xbf16, #tpu.memory_space<vmem>>, vector<12x32xbf16>
    %cst_14 = arith.constant dense<0.000000e+00> : vector<12x32xf32>
    %20 = tpu.matmul %19, %18, %cst_14 {dimension_numbers = #tpu.dot_dimension_numbers<[1], [0], [0], [1], [0, 0, 1, 1], [], []>} : vector<12x32xbf16>, vector<32x32xbf16>, vector<12x32xf32> -> vector<12x32xf32>
    %c16 = arith.constant 16 : index
    %c0_15 = arith.constant 0 : index
    %21 = vector.load %arg3[%c16, %c0_15] : memref<160x32xbf16, #tpu.memory_space<vmem>>, vector<12x32xbf16>
    %cst_16 = arith.constant dense<0.000000e+00> : vector<12x32xf32>
    %22 = tpu.matmul %21, %18, %cst_16 {dimension_numbers = #tpu.dot_dimension_numbers<[1], [0], [0], [1], [0, 0, 1, 1], [], []>} : vector<12x32xbf16>, vector<32x32xbf16>, vector<12x32xf32> -> vector<12x32xf32>
    %c32_17 = arith.constant 32 : index
    %c0_18 = arith.constant 0 : index
    %23 = vector.load %arg3[%c32_17, %c0_18] : memref<160x32xbf16, #tpu.memory_space<vmem>>, vector<12x32xbf16>
    %cst_19 = arith.constant dense<0.000000e+00> : vector<12x32xf32>
    %24 = tpu.matmul %23, %18, %cst_19 {dimension_numbers = #tpu.dot_dimension_numbers<[1], [0], [0], [1], [0, 0, 1, 1], [], []>} : vector<12x32xbf16>, vector<32x32xbf16>, vector<12x32xf32> -> vector<12x32xf32>
    %c48 = arith.constant 48 : index
    %c0_20 = arith.constant 0 : index
    %25 = vector.load %arg3[%c48, %c0_20] : memref<160x32xbf16, #tpu.memory_space<vmem>>, vector<12x32xbf16>
    %cst_21 = arith.constant dense<0.000000e+00> : vector<12x32xf32>
    %26 = tpu.matmul %25, %18, %cst_21 {dimension_numbers = #tpu.dot_dimension_numbers<[1], [0], [0], [1], [0, 0, 1, 1], [], []>} : vector<12x32xbf16>, vector<32x32xbf16>, vector<12x32xf32> -> vector<12x32xf32>
    %c64 = arith.constant 64 : index
    %c0_22 = arith.constant 0 : index
    %27 = vector.load %arg3[%c64, %c0_22] : memref<160x32xbf16, #tpu.memory_space<vmem>>, vector<12x32xbf16>
    %cst_23 = arith.constant dense<0.000000e+00> : vector<12x32xf32>
    %28 = tpu.matmul %27, %18, %cst_23 {dimension_numbers = #tpu.dot_dimension_numbers<[1], [0], [0], [1], [0, 0, 1, 1], [], []>} : vector<12x32xbf16>, vector<32x32xbf16>, vector<12x32xf32> -> vector<12x32xf32>
    %29 = tpu.concatenate %20, %22, %24, %26, %28 in 1 : vector<12x32xf32>, vector<12x32xf32>, vector<12x32xf32>, vector<12x32xf32>, vector<12x32xf32> -> vector<12x160xf32>
    %30 = arith.truncf %29 : vector<12x160xf32> to vector<12x160xbf16>
    %c160 = arith.constant 160 : index
    %c0_24 = arith.constant 0 : index
    %31 = vector.load %arg2[%c160, %c0_24] : memref<432x32xbf16, #tpu.memory_space<vmem>>, vector<160x24xbf16>
    %cst_25 = arith.constant dense<0.000000e+00> : vector<12x24xf32>
    %32 = tpu.matmul %30, %31, %cst_25 {dimension_numbers = #tpu.dot_dimension_numbers<[1], [0], [0], [1], [0, 0, 1, 1], [], []>} : vector<12x160xbf16>, vector<160x24xbf16>, vector<12x24xf32> -> vector<12x24xf32>
    %c112 = arith.constant 112 : index
    %c0_26 = arith.constant 0 : index
    %33 = vector.load %arg2[%c112, %c0_26] : memref<432x32xbf16, #tpu.memory_space<vmem>>, vector<24x24xbf16>
    %34 = arith.truncf %32 : vector<12x24xf32> to vector<12x24xbf16>
    %35 = arith.extf %34 : vector<12x24xbf16> to vector<12x24xf32>
    %36 = arith.subf %32, %35 : vector<12x24xf32>
    %37 = arith.truncf %36 : vector<12x24xf32> to vector<12x24xbf16>
    %cst_27 = arith.constant dense<0.000000e+00> : vector<12x24xf32>
    %38 = tpu.matmul %34, %33, %cst_27 {dimension_numbers = #tpu.dot_dimension_numbers<[1], [0], [0], [1], [0, 0, 1, 1], [], []>} : vector<12x24xbf16>, vector<24x24xbf16>, vector<12x24xf32> -> vector<12x24xf32>
    %cst_28 = arith.constant dense<0.000000e+00> : vector<12x24xf32>
    %39 = tpu.matmul %37, %33, %cst_28 {dimension_numbers = #tpu.dot_dimension_numbers<[1], [0], [0], [1], [0, 0, 1, 1], [], []>} : vector<12x24xbf16>, vector<24x24xbf16>, vector<12x24xf32> -> vector<12x24xf32>
    %40 = arith.addf %38, %39 : vector<12x24xf32>
    %41 = arith.mulf %32, %32 : vector<12x24xf32>
    %42 = arith.truncf %41 : vector<12x24xf32> to vector<12x24xbf16>
    %43 = arith.extf %42 : vector<12x24xbf16> to vector<12x24xf32>
    %44 = arith.subf %41, %43 : vector<12x24xf32>
    %45 = arith.truncf %44 : vector<12x24xf32> to vector<12x24xbf16>
    %cst_29 = arith.constant dense<0.000000e+00> : vector<12x24xf32>
    %46 = tpu.matmul %42, %33, %cst_29 {dimension_numbers = #tpu.dot_dimension_numbers<[1], [0], [0], [1], [0, 0, 1, 1], [], []>} : vector<12x24xbf16>, vector<24x24xbf16>, vector<12x24xf32> -> vector<12x24xf32>
    %cst_30 = arith.constant dense<0.000000e+00> : vector<12x24xf32>
    %47 = tpu.matmul %45, %33, %cst_30 {dimension_numbers = #tpu.dot_dimension_numbers<[1], [0], [0], [1], [0, 0, 1, 1], [], []>} : vector<12x24xbf16>, vector<24x24xbf16>, vector<12x24xf32> -> vector<12x24xf32>
    %48 = arith.addf %46, %47 : vector<12x24xf32>
    %cst_31 = arith.constant dense<0.000000e+00> : vector<24xf32>
    %49 = vector.multi_reduction <add>, %40, %cst_31 [0] : vector<12x24xf32> to vector<24xf32>
    %50 = vector.shape_cast %49 : vector<24xf32> to vector<1x24xf32>
    %cst_32 = arith.constant 0.013888889 : f32
    %51 = vector.broadcast %cst_32 : f32 to vector<1x24xf32>
    %52 = arith.mulf %50, %51 : vector<1x24xf32>
    %cst_33 = arith.constant dense<0.000000e+00> : vector<24xf32>
    %53 = vector.multi_reduction <add>, %48, %cst_33 [0] : vector<12x24xf32> to vector<24xf32>
    %54 = vector.shape_cast %53 : vector<24xf32> to vector<1x24xf32>
    %cst_34 = arith.constant 0.013888889 : f32
    %55 = vector.broadcast %cst_34 : f32 to vector<1x24xf32>
    %56 = arith.mulf %54, %55 : vector<1x24xf32>
    %57 = arith.mulf %52, %52 : vector<1x24xf32>
    %58 = arith.subf %56, %57 : vector<1x24xf32>
    %cst_35 = arith.constant 0.000000e+00 : f32
    %59 = vector.broadcast %cst_35 : f32 to vector<1x24xf32>
    %60 = arith.maximumf %58, %59 : vector<1x24xf32>
    %61 = vector.broadcast %52 : vector<1x24xf32> to vector<12x24xf32>
    %62 = arith.subf %32, %61 : vector<12x24xf32>
    %cst_36 = arith.constant 9.99999974E-6 : f32
    %63 = vector.broadcast %cst_36 : f32 to vector<1x24xf32>
    %64 = arith.addf %60, %63 : vector<1x24xf32>
    %65 = math.rsqrt %64 : vector<1x24xf32>
    %66 = vector.broadcast %65 : vector<1x24xf32> to vector<12x24xf32>
    %67 = arith.mulf %62, %66 : vector<12x24xf32>
    %cst_37 = arith.constant 0.000000e+00 : f32
    %68 = vector.broadcast %cst_37 : f32 to vector<12x24xf32>
    %69 = arith.maximumf %67, %68 : vector<12x24xf32>
    %70 = arith.truncf %69 : vector<12x24xf32> to vector<12x24xbf16>
    %c80 = arith.constant 80 : index
    %c0_38 = arith.constant 0 : index
    %71 = vector.load %arg3[%c80, %c0_38] : memref<160x32xbf16, #tpu.memory_space<vmem>>, vector<4x12xbf16>
    %cst_39 = arith.constant dense<0.000000e+00> : vector<4x24xf32>
    %72 = tpu.matmul %71, %70, %cst_39 {dimension_numbers = #tpu.dot_dimension_numbers<[1], [0], [0], [1], [0, 0, 1, 1], [], []>} : vector<4x12xbf16>, vector<12x24xbf16>, vector<4x24xf32> -> vector<4x24xf32>
    %c96 = arith.constant 96 : index
    %c0_40 = arith.constant 0 : index
    %73 = vector.load %arg3[%c96, %c0_40] : memref<160x32xbf16, #tpu.memory_space<vmem>>, vector<4x12xbf16>
    %cst_41 = arith.constant dense<0.000000e+00> : vector<4x24xf32>
    %74 = tpu.matmul %73, %70, %cst_41 {dimension_numbers = #tpu.dot_dimension_numbers<[1], [0], [0], [1], [0, 0, 1, 1], [], []>} : vector<4x12xbf16>, vector<12x24xbf16>, vector<4x24xf32> -> vector<4x24xf32>
    %c112_42 = arith.constant 112 : index
    %c0_43 = arith.constant 0 : index
    %75 = vector.load %arg3[%c112_42, %c0_43] : memref<160x32xbf16, #tpu.memory_space<vmem>>, vector<4x12xbf16>
    %cst_44 = arith.constant dense<0.000000e+00> : vector<4x24xf32>
    %76 = tpu.matmul %75, %70, %cst_44 {dimension_numbers = #tpu.dot_dimension_numbers<[1], [0], [0], [1], [0, 0, 1, 1], [], []>} : vector<4x12xbf16>, vector<12x24xbf16>, vector<4x24xf32> -> vector<4x24xf32>
    %77 = tpu.concatenate %72, %74, %76 in 1 : vector<4x24xf32>, vector<4x24xf32>, vector<4x24xf32> -> vector<4x72xf32>
    %78 = arith.truncf %77 : vector<4x72xf32> to vector<4x72xbf16>
    %c320 = arith.constant 320 : index
    %c0_45 = arith.constant 0 : index
    %79 = vector.load %arg2[%c320, %c0_45] : memref<432x32xbf16, #tpu.memory_space<vmem>>, vector<72x16xbf16>
    %cst_46 = arith.constant dense<0.000000e+00> : vector<4x16xf32>
    %80 = tpu.matmul %78, %79, %cst_46 {dimension_numbers = #tpu.dot_dimension_numbers<[1], [0], [0], [1], [0, 0, 1, 1], [], []>} : vector<4x72xbf16>, vector<72x16xbf16>, vector<4x16xf32> -> vector<4x16xf32>
    %c144 = arith.constant 144 : index
    %c0_47 = arith.constant 0 : index
    %81 = vector.load %arg2[%c144, %c0_47] : memref<432x32xbf16, #tpu.memory_space<vmem>>, vector<16x16xbf16>
    %82 = arith.truncf %80 : vector<4x16xf32> to vector<4x16xbf16>
    %83 = arith.extf %82 : vector<4x16xbf16> to vector<4x16xf32>
    %84 = arith.subf %80, %83 : vector<4x16xf32>
    %85 = arith.truncf %84 : vector<4x16xf32> to vector<4x16xbf16>
    %cst_48 = arith.constant dense<0.000000e+00> : vector<4x16xf32>
    %86 = tpu.matmul %82, %81, %cst_48 {dimension_numbers = #tpu.dot_dimension_numbers<[1], [0], [0], [1], [0, 0, 1, 1], [], []>} : vector<4x16xbf16>, vector<16x16xbf16>, vector<4x16xf32> -> vector<4x16xf32>
    %cst_49 = arith.constant dense<0.000000e+00> : vector<4x16xf32>
    %87 = tpu.matmul %85, %81, %cst_49 {dimension_numbers = #tpu.dot_dimension_numbers<[1], [0], [0], [1], [0, 0, 1, 1], [], []>} : vector<4x16xbf16>, vector<16x16xbf16>, vector<4x16xf32> -> vector<4x16xf32>
    %88 = arith.addf %86, %87 : vector<4x16xf32>
    %89 = arith.mulf %80, %80 : vector<4x16xf32>
    %90 = arith.truncf %89 : vector<4x16xf32> to vector<4x16xbf16>
    %91 = arith.extf %90 : vector<4x16xbf16> to vector<4x16xf32>
    %92 = arith.subf %89, %91 : vector<4x16xf32>
    %93 = arith.truncf %92 : vector<4x16xf32> to vector<4x16xbf16>
    %cst_50 = arith.constant dense<0.000000e+00> : vector<4x16xf32>
    %94 = tpu.matmul %90, %81, %cst_50 {dimension_numbers = #tpu.dot_dimension_numbers<[1], [0], [0], [1], [0, 0, 1, 1], [], []>} : vector<4x16xbf16>, vector<16x16xbf16>, vector<4x16xf32> -> vector<4x16xf32>
    %cst_51 = arith.constant dense<0.000000e+00> : vector<4x16xf32>
    %95 = tpu.matmul %93, %81, %cst_51 {dimension_numbers = #tpu.dot_dimension_numbers<[1], [0], [0], [1], [0, 0, 1, 1], [], []>} : vector<4x16xbf16>, vector<16x16xbf16>, vector<4x16xf32> -> vector<4x16xf32>
    %96 = arith.addf %94, %95 : vector<4x16xf32>
    %cst_52 = arith.constant dense<0.000000e+00> : vector<16xf32>
    %97 = vector.multi_reduction <add>, %88, %cst_52 [0] : vector<4x16xf32> to vector<16xf32>
    %98 = vector.shape_cast %97 : vector<16xf32> to vector<1x16xf32>
    %cst_53 = arith.constant 1.250000e-01 : f32
    %99 = vector.broadcast %cst_53 : f32 to vector<1x16xf32>
    %100 = arith.mulf %98, %99 : vector<1x16xf32>
    %cst_54 = arith.constant dense<0.000000e+00> : vector<16xf32>
    %101 = vector.multi_reduction <add>, %96, %cst_54 [0] : vector<4x16xf32> to vector<16xf32>
    %102 = vector.shape_cast %101 : vector<16xf32> to vector<1x16xf32>
    %cst_55 = arith.constant 1.250000e-01 : f32
    %103 = vector.broadcast %cst_55 : f32 to vector<1x16xf32>
    %104 = arith.mulf %102, %103 : vector<1x16xf32>
    %105 = arith.mulf %100, %100 : vector<1x16xf32>
    %106 = arith.subf %104, %105 : vector<1x16xf32>
    %cst_56 = arith.constant 0.000000e+00 : f32
    %107 = vector.broadcast %cst_56 : f32 to vector<1x16xf32>
    %108 = arith.maximumf %106, %107 : vector<1x16xf32>
    %109 = vector.broadcast %100 : vector<1x16xf32> to vector<4x16xf32>
    %110 = arith.subf %80, %109 : vector<4x16xf32>
    %cst_57 = arith.constant 9.99999974E-6 : f32
    %111 = vector.broadcast %cst_57 : f32 to vector<1x16xf32>
    %112 = arith.addf %108, %111 : vector<1x16xf32>
    %113 = math.rsqrt %112 : vector<1x16xf32>
    %114 = vector.broadcast %113 : vector<1x16xf32> to vector<4x16xf32>
    %115 = arith.mulf %110, %114 : vector<4x16xf32>
    %cst_58 = arith.constant 0.000000e+00 : f32
    %116 = vector.broadcast %cst_58 : f32 to vector<4x16xf32>
    %117 = arith.maximumf %115, %116 : vector<4x16xf32>
    %118 = arith.truncf %117 : vector<4x16xf32> to vector<4x16xbf16>
    %c128 = arith.constant 128 : index
    %c0_59 = arith.constant 0 : index
    %119 = vector.load %arg3[%c128, %c0_59] : memref<160x32xbf16, #tpu.memory_space<vmem>>, vector<2x4xbf16>
    %cst_60 = arith.constant dense<0.000000e+00> : vector<2x16xf32>
    %120 = tpu.matmul %119, %118, %cst_60 {dimension_numbers = #tpu.dot_dimension_numbers<[1], [0], [0], [1], [0, 0, 1, 1], [], []>} : vector<2x4xbf16>, vector<4x16xbf16>, vector<2x16xf32> -> vector<2x16xf32>
    %c144_61 = arith.constant 144 : index
    %c0_62 = arith.constant 0 : index
    %121 = vector.load %arg3[%c144_61, %c0_62] : memref<160x32xbf16, #tpu.memory_space<vmem>>, vector<2x4xbf16>
    %cst_63 = arith.constant dense<0.000000e+00> : vector<2x16xf32>
    %122 = tpu.matmul %121, %118, %cst_63 {dimension_numbers = #tpu.dot_dimension_numbers<[1], [0], [0], [1], [0, 0, 1, 1], [], []>} : vector<2x4xbf16>, vector<4x16xbf16>, vector<2x16xf32> -> vector<2x16xf32>
    %123 = tpu.concatenate %120, %122 in 1 : vector<2x16xf32>, vector<2x16xf32> -> vector<2x32xf32>
    %124 = arith.truncf %123 : vector<2x32xf32> to vector<2x32xbf16>
    %c400 = arith.constant 400 : index
    %c0_64 = arith.constant 0 : index
    %125 = vector.load %arg2[%c400, %c0_64] : memref<432x32xbf16, #tpu.memory_space<vmem>>, vector<32x8xbf16>
    %cst_65 = arith.constant dense<0.000000e+00> : vector<2x8xf32>
    %126 = tpu.matmul %124, %125, %cst_65 {dimension_numbers = #tpu.dot_dimension_numbers<[1], [0], [0], [1], [0, 0, 1, 1], [], []>} : vector<2x32xbf16>, vector<32x8xbf16>, vector<2x8xf32> -> vector<2x8xf32>
    %cst_66 = arith.constant dense<0.000000e+00> : vector<8xf32>
    %127 = vector.multi_reduction <add>, %126, %cst_66 [0] : vector<2x8xf32> to vector<8xf32>
    %128 = vector.shape_cast %127 : vector<8xf32> to vector<1x8xf32>
    %cst_67 = arith.constant 2.000000e+00 : f32
    %129 = vector.broadcast %cst_67 : f32 to vector<1x8xf32>
    %130 = arith.divf %128, %129 : vector<1x8xf32>
    %131 = vector.broadcast %130 : vector<1x8xf32> to vector<2x8xf32>
    %132 = arith.subf %126, %131 : vector<2x8xf32>
    %133 = arith.mulf %132, %132 : vector<2x8xf32>
    %cst_68 = arith.constant dense<0.000000e+00> : vector<8xf32>
    %134 = vector.multi_reduction <add>, %133, %cst_68 [0] : vector<2x8xf32> to vector<8xf32>
    %135 = vector.shape_cast %134 : vector<8xf32> to vector<1x8xf32>
    %cst_69 = arith.constant 2.000000e+00 : f32
    %136 = vector.broadcast %cst_69 : f32 to vector<1x8xf32>
    %137 = arith.divf %135, %136 : vector<1x8xf32>
    %cst_70 = arith.constant 9.99999974E-6 : f32
    %138 = vector.broadcast %cst_70 : f32 to vector<1x8xf32>
    %139 = arith.addf %137, %138 : vector<1x8xf32>
    %140 = math.rsqrt %139 : vector<1x8xf32>
    %141 = vector.broadcast %140 : vector<1x8xf32> to vector<2x8xf32>
    %142 = arith.mulf %132, %141 : vector<2x8xf32>
    %cst_71 = arith.constant 0.000000e+00 : f32
    %143 = vector.broadcast %cst_71 : f32 to vector<2x8xf32>
    %144 = arith.maximumf %142, %143 : vector<2x8xf32>
    %145 = arith.truncf %16 : vector<2x32xf32> to vector<2x32xbf16>
    %c64_72 = arith.constant 64 : index
    %c0_73 = arith.constant 0 : index
    %146 = vector.load %arg2[%c64_72, %c0_73] : memref<432x32xbf16, #tpu.memory_space<vmem>>, vector<32x8xbf16>
    %cst_74 = arith.constant dense<0.000000e+00> : vector<2x8xf32>
    %147 = tpu.matmul %145, %146, %cst_74 {dimension_numbers = #tpu.dot_dimension_numbers<[1], [0], [0], [1], [0, 0, 1, 1], [], []>} : vector<2x32xbf16>, vector<32x8xbf16>, vector<2x8xf32> -> vector<2x8xf32>
    %148 = arith.truncf %144 : vector<2x8xf32> to vector<2x8xbf16>
    %c96_75 = arith.constant 96 : index
    %c0_76 = arith.constant 0 : index
    %149 = vector.load %arg2[%c96_75, %c0_76] : memref<432x32xbf16, #tpu.memory_space<vmem>>, vector<8x8xbf16>
    %cst_77 = arith.constant dense<0.000000e+00> : vector<2x8xf32>
    %150 = tpu.matmul %148, %149, %cst_77 {dimension_numbers = #tpu.dot_dimension_numbers<[1], [0], [0], [1], [0, 0, 1, 1], [], []>} : vector<2x8xbf16>, vector<8x8xbf16>, vector<2x8xf32> -> vector<2x8xf32>
    %151 = arith.addf %147, %150 : vector<2x8xf32>
    %c16_78 = arith.constant 16 : index
    %c0_79 = arith.constant 0 : index
    %152 = vector.load %arg4[%c16_78, %c0_79] : memref<24x32xf32, #tpu.memory_space<vmem>>, vector<1x8xf32>
    %153 = vector.broadcast %152 : vector<1x8xf32> to vector<2x8xf32>
    %154 = arith.addf %151, %153 : vector<2x8xf32>
    %c0_80 = arith.constant 0 : index
    %c0_81 = arith.constant 0 : index
    %155 = vector.load %arg5[%c0_80, %c0_81] : memref<2x8xf32, #tpu.memory_space<vmem>>, vector<2x8xf32>
    tpu.vector_store %arg5[%c0_80, %c0_81], %154 {strides = array<i32>} : memref<2x8xf32, #tpu.memory_space<vmem>>, vector<2x8xf32>,
    return
  }
}

</mosaic_0001>

<llo_original>
// kernel: dqn_forward.1
$region0: #{dqn_forward.1}
  #allocation0 [shape = 'u32[]', space=smem, size = 0x4, offset = 0x4, fixed_abs, tag = 'smem constant byte address 0x4 - core index']
  #allocation1 [shape = 'u32[72,128]{1,0:T(1,128)}', space=vmem, size = 0x9000, scoped, tag = 'internal scratch']
  %s0 = inlined_call_operand.vmem [shape: f32[2,24], index: 0, kind: input, shape index: {}]
  %s1 = inlined_call_operand.vmem [shape: f32[32,32], index: 1, kind: input, shape index: {}]
  %s2 = inlined_call_operand.vmem [shape: bf16[432,32], index: 2, kind: input, shape index: {}]
  %s3 = inlined_call_operand.vmem [shape: bf16[160,32], index: 3, kind: input, shape index: {}]
  %s4 = inlined_call_operand.vmem [shape: f32[24,32], index: 4, kind: input, shape index: {}]
  %s5 = inlined_call_operand.hbm [shape: f32[2,8], index: 5, kind: output, shape index: {}]
  %s6 = sld [smem:[#allocation0]]
  $region30: #{dqn_forward.1} parent=0
    _
  %s8 = ssub.s32 1, %s6
  %s9 = scalar_select 0, %s8, %s6
  $region1: #{dqn_forward.1} parent=0
    #allocation2 [shape = 'u8[1024]{0}', space=vmem, size = 0x400, scoped, tag = 'output window, operand 0, single buffered']
    #allocation3 [shape = 's32[1]{0}', space=sflag, size = 0x4, scoped, tag = 'scoped memory for dqn_forward.1']
    %10 = vsyncpa [#allocation3], 0
    // Predicated region
    $region2: #{dqn_forward.1} parent=1 // pred_check
      _
    $region3: #{dqn_forward.1} parent=1 // pred_check_branch
      %12 = sbr.rel (0) target = $region5
    $region4: #{dqn_forward.1} parent=1 // pred_region
      _
    $region5: #{dqn_forward.1} parent=1 // pred_fallthru
      _
    // Predicated region
    $region6: #{dqn_forward.1} parent=1 // pred_check
      _
    $region7: #{dqn_forward.1} parent=1 // pred_check_branch
      %14 = sbr.rel (0) target = $region9
    $region8: #{dqn_forward.1} parent=1 // pred_region
      _
    $region9: #{dqn_forward.1} parent=1 // pred_fallthru
      _
    // Predicated region
    $region10: #{dqn_forward.1} parent=1 // pred_check
      _
    $region11: #{dqn_forward.1} parent=1 // pred_check_branch
      %16 = sbr.rel (0) target = $region13
    $region12: #{dqn_forward.1} parent=1 // pred_region
      _
    $region13: #{dqn_forward.1} parent=1 // pred_fallthru
      _
    // Predicated region
    $region14: #{dqn_forward.1} parent=1 // pred_check
      _
    $region15: #{dqn_forward.1} parent=1 // pred_check_branch
      %18 = sbr.rel (0) target = $region17
    $region16: #{dqn_forward.1} parent=1 // pred_region
      _
    $region17: #{dqn_forward.1} parent=1 // pred_fallthru
      _
    // Predicated region
    $region18: #{dqn_forward.1} parent=1 // pred_check
      _
    $region19: #{dqn_forward.1} parent=1 // pred_check_branch
      %20 = sbr.rel (0) target = $region21
    $region20: #{dqn_forward.1} parent=1 // pred_region
      _
    $region21: #{dqn_forward.1} parent=1 // pred_fallthru
      _
    %v22 = vld [vmem:[%s0] sm:$0x3]
    %v23 = vpack.c.bf16 %v22, %v22
    %v24 = vld [vmem:[%s2] sm:$0xf]
    %v25 = vld [vmem:[%s2 + $0x4] sm:$0xf]
    %v26 = vld [vmem:[%s2 + $0x8] sm:$0xf]
    %v27 = vld [vmem:[%s4] sm:$0x1]
    %v28 = vperm.slane %v27, 0
    %v32 = vunpack.c.l.b16 %v24
    %v33 = vunpack.c.l.b16 %v25
    %v34 = vunpack.c.l.b16 %v26
    %v35 = vpack.c.b16 %v33, %v32
    %v36 = vpack.c.b16 %v34, %v34
    %vm38 = vcmask 195584
    %v40 = vsel %vm38, %v23, 0
    %vm42 = vcmask 1043456
    %v44 = vsel %vm42, %v36, 0
    %46 = vmatpush.bf16.msra.mxu0 0
    %47 = vmatpush.bf16.msra.mxu0 0
    %48 = vmatpush.bf16.msra.mxu0 0
    %49 = vmatpush.bf16.msra.mxu0 0
    %50 = vmatpush.bf16.msra.mxu0 0
    %51 = vmatpush.bf16.msra.mxu0 0
    %52 = vmatpush.bf16.msra.mxu0 %v44
    %53 = vmatpush.bf16.msra.mxu0 %v35
    %54 = vmatmul.bf16.gmra.mxu0 %v40
    %v55 = vpop.f32.mrf.mxu0
    %v56 = vadd.f32 %v28, %v55
    %v57 = vpop.f32.mrf.mxu0
    %58 = vdwg.mxu0
    %v59 = vmax.f32 %v56, 0.0
    %v60 = vpack.c.bf16 %v59, %v59
    %v61 = vld [vmem:[%s2 + $0x10] sm:$0xf]
    %v62 = vld [vmem:[%s2 + $0x14] sm:$0xf]
    %v63 = vld [vmem:[%s2 + $0x18] sm:$0xf]
    %v64 = vld [vmem:[%s2 + $0x1c] sm:$0xf]
    %v65 = vld [vmem:[%s4 + $0x8] sm:$0x1]
    %v66 = vperm.slane %v65, 0
    %v71 = vunpack.c.l.b16 %v61
    %v72 = vunpack.c.l.b16 %v62
    %v73 = vunpack.c.l.b16 %v63
    %v74 = vunpack.c.l.b16 %v64
    %v75 = vpack.c.b16 %v72, %v71
    %v76 = vpack.c.b16 %v74, %v73
    %vm79 = vcmask 261120
    %v81 = vsel %vm79, %v60, 0
    %83 = vmatpush.bf16.msra.mxu0 0
    %84 = vmatpush.bf16.msra.mxu0 0
    %85 = vmatpush.bf16.msra.mxu0 0
    %86 = vmatpush.bf16.msra.mxu0 0
    %87 = vmatpush.bf16.msra.mxu0 0
    %88 = vmatpush.bf16.msra.mxu0 0
    %89 = vmatpush.bf16.msra.mxu0 %v76
    %90 = vmatpush.bf16.msra.mxu0 %v75
    %91 = vmatmul.bf16.gmra.mxu0 %v81
    %v92 = vpop.f32.mrf.mxu0
    %v93 = vadd.f32 %v66, %v92
    %v94 = vpop.f32.mrf.mxu0
    %95 = vdwg.mxu0
    %v96 = vmax.f32 %v93, 0.0
    %v97 = vld [vmem:[%s1] sm:$0xff]
    %v98 = vld [vmem:[%s1 + $0x8] sm:$0xff]
    %v99 = vld [vmem:[%s1 + $0x10] sm:$0xff]
    %v100 = vld [vmem:[%s1 + $0x18] sm:$0xff]
    %v101 = vpack.c.bf16 %v98, %v97
    %v102 = vpack.c.bf16 %v100, %v99
    %v103 = vld [vmem:[%s3] sm:$0xf]
    %v104 = vld [vmem:[%s3 + $0x4] sm:$0x3]
    %v107 = vunpack.c.l.b16 %v103
    %v108 = vunpack.c.l.b16 %v104
    %v109 = vpack.c.b16 %v108, %v107
    %v111 = vsel %vm79, %v109, 0
    %113 = vmatpush.bf16.msra.mxu0 0
    %114 = vmatpush.bf16.msra.mxu0 0
    %115 = vmatpush.bf16.msra.mxu0 0
    %116 = vmatpush.bf16.msra.mxu0 0
    %117 = vmatpush.bf16.msra.mxu0 0
    %118 = vmatpush.bf16.msra.mxu0 0
    %119 = vmatpush.bf16.msra.mxu0 %v102
    %120 = vmatpush.bf16.msra.mxu0 %v101
    %121 = vmatmul.bf16.gmra.mxu0 %v111
    %v122 = vpop.f32.mrf.mxu0
    %v123 = vadd.f32 0.0, %v122
    %v124 = vpop.f32.mrf.mxu0
    %v125 = vadd.f32 0.0, %v124
    %126 = vdwg.mxu0
    %v127 = vld [vmem:[%s3 + $0x8] sm:$0xf]
    %v128 = vld [vmem:[%s3 + $0xc] sm:$0x3]
    %v131 = vunpack.c.l.b16 %v127
    %v132 = vunpack.c.l.b16 %v128
    %v133 = vpack.c.b16 %v132, %v131
    %v135 = vsel %vm79, %v133, 0
    %137 = vmatpush.bf16.msra.mxu0 0
    %138 = vmatpush.bf16.msra.mxu0 0
    %139 = vmatpush.bf16.msra.mxu0 0
    %140 = vmatpush.bf16.msra.mxu0 0
    %141 = vmatpush.bf16.msra.mxu0 0
    %142 = vmatpush.bf16.msra.mxu0 0
    %143 = vmatpush.bf16.msra.mxu0 %v102
    %144 = vmatpush.bf16.msra.mxu0 %v101
    %145 = vmatmul.bf16.gmra.mxu0 %v135
    %v146 = vpop.f32.mrf.mxu0
    %v147 = vadd.f32 0.0, %v146
    %v148 = vpop.f32.mrf.mxu0
    %v149 = vadd.f32 0.0, %v148
    %150 = vdwg.mxu0
    %v151 = vld [vmem:[%s3 + $0x10] sm:$0xf]
    %v152 = vld [vmem:[%s3 + $0x14] sm:$0x3]
    %v155 = vunpack.c.l.b16 %v151
    %v156 = vunpack.c.l.b16 %v152
    %v157 = vpack.c.b16 %v156, %v155
    %v159 = vsel %vm79, %v157, 0
    %161 = vmatpush.bf16.msra.mxu0 0
    %162 = vmatpush.bf16.msra.mxu0 0
    %163 = vmatpush.bf16.msra.mxu0 0
    %164 = vmatpush.bf16.msra.mxu0 0
    %165 = vmatpush.bf16.msra.mxu0 0
    %166 = vmatpush.bf16.msra.mxu0 0
    %167 = vmatpush.bf16.msra.mxu0 %v102
    %168 = vmatpush.bf16.msra.mxu0 %v101
    %169 = vmatmul.bf16.gmra.mxu0 %v159
    %v170 = vpop.f32.mrf.mxu0
    %v171 = vadd.f32 0.0, %v170
    %v172 = vpop.f32.mrf.mxu0
    %v173 = vadd.f32 0.0, %v172
    %174 = vdwg.mxu0
    %v175 = vld [vmem:[%s3 + $0x18] sm:$0xf]
    %v176 = vld [vmem:[%s3 + $0x1c] sm:$0x3]
    %v179 = vunpack.c.l.b16 %v175
    %v180 = vunpack.c.l.b16 %v176
    %v181 = vpack.c.b16 %v180, %v179
    %v183 = vsel %vm79, %v181, 0
    %185 = vmatpush.bf16.msra.mxu0 0
    %186 = vmatpush.bf16.msra.mxu0 0
    %187 = vmatpush.bf16.msra.mxu0 0
    %188 = vmatpush.bf16.msra.mxu0 0
    %189 = vmatpush.bf16.msra.mxu0 0
    %190 = vmatpush.bf16.msra.mxu0 0
    %191 = vmatpush.bf16.msra.mxu0 %v102
    %192 = vmatpush.bf16.msra.mxu0 %v101
    %193 = vmatmul.bf16.gmra.mxu0 %v183
    %v194 = vpop.f32.mrf.mxu0
    %v195 = vadd.f32 0.0, %v194
    %v196 = vpop.f32.mrf.mxu0
    %v197 = vadd.f32 0.0, %v196
    %198 = vdwg.mxu0
    %v199 = vld [vmem:[%s3 + $0x20] sm:$0xf]
    %v200 = vld [vmem:[%s3 + $0x24] sm:$0x3]
    %v203 = vunpack.c.l.b16 %v199
    %v204 = vunpack.c.l.b16 %v200
    %v205 = vpack.c.b16 %v204, %v203
    %v207 = vsel %vm79, %v205, 0
    %209 = vmatpush.bf16.msra.mxu0 0
    %210 = vmatpush.bf16.msra.mxu0 0
    %211 = vmatpush.bf16.msra.mxu0 0
    %212 = vmatpush.bf16.msra.mxu0 0
    %213 = vmatpush.bf16.msra.mxu0 0
    %214 = vmatpush.bf16.msra.mxu0 0
    %215 = vmatpush.bf16.msra.mxu0 %v102
    %216 = vmatpush.bf16.msra.mxu0 %v101
    %217 = vmatmul.bf16.gmra.mxu0 %v207
    %v218 = vpop.f32.mrf.mxu0
    %v219 = vadd.f32 0.0, %v218
    %v220 = vpop.f32.mrf.mxu0
    %v221 = vadd.f32 0.0, %v220
    %222 = vdwg.mxu0
    %225 = vrot.lane.b32.xlu0 %v147, 32
    %v226 = vpop.permute.xlu0 %225
    %227 = vrot.lane.b32.xlu0 %v149, 32
    %v228 = vpop.permute.xlu0 %227
    %233 = vrot.lane.b32.xlu0 %v171, 64
    %v234 = vpop.permute.xlu0 %233
    %235 = vrot.lane.b32.xlu0 %v173, 64
    %v236 = vpop.permute.xlu0 %235
    %241 = vrot.lane.b32.xlu0 %v195, 96
    %v242 = vpop.permute.xlu0 %241
    %243 = vrot.lane.b32.xlu0 %v197, 96
    %v244 = vpop.permute.xlu0 %243
    %v247 = vsel %vm79, %v123, %v226
    %v248 = vsel %vm79, %v125, %v228
    %vm249 = vcmask 523264
    %v250 = vsel %vm249, %v247, %v234
    %v251 = vsel %vm249, %v248, %v236
    %vm252 = vcmask 785408
    %v253 = vsel %vm252, %v250, %v242
    %v254 = vsel %vm252, %v251, %v244
    %v255 = vpack.c.bf16 %v254, %v253
    %v256 = vpack.c.bf16 %v221, %v219
    %v257 = vld [vmem:[%s2 + $0x50] sm:$0xf]
    %v258 = vld [vmem:[%s2 + $0x54] sm:$0xf]
    %v259 = vld [vmem:[%s2 + $0x58] sm:$0xf]
    %v260 = vld [vmem:[%s2 + $0x5c] sm:$0xf]
    %v261 = vld [vmem:[%s2 + $0x60] sm:$0xf]
    %v262 = vld [vmem:[%s2 + $0x64] sm:$0xf]
    %v263 = vld [vmem:[%s2 + $0x68] sm:$0xf]
    %v264 = vld [vmem:[%s2 + $0x6c] sm:$0xf]
    %v265 = vld [vmem:[%s2 + $0x70] sm:$0xf]
    %v266 = vld [vmem:[%s2 + $0x74] sm:$0xf]
    %v267 = vld [vmem:[%s2 + $0x78] sm:$0xf]
    %v268 = vld [vmem:[%s2 + $0x7c] sm:$0xf]
    %v269 = vld [vmem:[%s2 + $0x80] sm:$0xf]
    %v270 = vld [vmem:[%s2 + $0x84] sm:$0xf]
    %v271 = vld [vmem:[%s2 + $0x88] sm:$0xf]
    %v272 = vld [vmem:[%s2 + $0x8c] sm:$0xf]
    %v273 = vld [vmem:[%s2 + $0x90] sm:$0xf]
    %v274 = vld [vmem:[%s2 + $0x94] sm:$0xf]
    %v275 = vld [vmem:[%s2 + $0x98] sm:$0xf]
    %v276 = vld [vmem:[%s2 + $0x9c] sm:$0xf]
    %v297 = vunpack.c.l.b16 %v257
    %v298 = vunpack.c.l.b16 %v258
    %v299 = vunpack.c.l.b16 %v259
    %v300 = vunpack.c.l.b16 %v260
    %v301 = vunpack.c.l.b16 %v261
    %v302 = vunpack.c.l.b16 %v262
    %v303 = vunpack.c.l.b16 %v263
    %v304 = vunpack.c.l.b16 %v264
    %v305 = vunpack.c.l.b16 %v265
    %v306 = vunpack.c.l.b16 %v266
    %v307 = vunpack.c.l.b16 %v267
    %v308 = vunpack.c.l.b16 %v268
    %v309 = vunpack.c.l.b16 %v269
    %v310 = vunpack.c.l.b16 %v270
    %v311 = vunpack.c.l.b16 %v271
    %v312 = vunpack.c.l.b16 %v272
    %v313 = vunpack.c.l.b16 %v273
    %v314 = vunpack.c.l.b16 %v274
    %v315 = vunpack.c.l.b16 %v275
    %v316 = vunpack.c.l.b16 %v276
    %v317 = vpack.c.b16 %v298, %v297
    %v318 = vpack.c.b16 %v300, %v299
    %v319 = vpack.c.b16 %v302, %v301
    %v320 = vpack.c.b16 %v304, %v303
    %v321 = vpack.c.b16 %v306, %v305
    %v322 = vpack.c.b16 %v308, %v307
    %v323 = vpack.c.b16 %v310, %v309
    %v324 = vpack.c.b16 %v312, %v311
    %v325 = vpack.c.b16 %v314, %v313
    %v326 = vpack.c.b16 %v316, %v315
    %v338 = vsel %vm79, %v256, 0
    %340 = vmatpush.bf16.msra.mxu0 %v324
    %341 = vmatpush.bf16.msra.mxu0 %v323
    %342 = vmatpush.bf16.msra.mxu0 %v322
    %343 = vmatpush.bf16.msra.mxu0 %v321
    %344 = vmatpush.bf16.msra.mxu0 %v320
    %345 = vmatpush.bf16.msra.mxu0 %v319
    %346 = vmatpush.bf16.msra.mxu0 %v318
    %347 = vmatpush.bf16.msra.mxu0 %v317
    %348 = vmatmul.bf16.gmra.mxu0 %v255
    %v349 = vpop.f32.mrf.mxu0
    %v350 = vadd.f32 0.0, %v349
    %v351 = vpop.f32.mrf.mxu0
    %v352 = vadd.f32 0.0, %v351
    %353 = vdwg.mxu0
    %354 = vmatpush.bf16.msra.mxu0 0
    %355 = vmatpush.bf16.msra.mxu0 0
    %356 = vmatpush.bf16.msra.mxu0 0
    %357 = vmatpush.bf16.msra.mxu0 0
    %358 = vmatpush.bf16.msra.mxu0 0
    %359 = vmatpush.bf16.msra.mxu0 0
    %360 = vmatpush.bf16.msra.mxu0 %v326
    %361 = vmatpush.bf16.msra.mxu0 %v325
    %362 = vmatmul.bf16.gmra.mxu0 %v338
    %v363 = vpop.f32.mrf.mxu0
    %v364 = vadd.f32 %v350, %v363
    %v365 = vpop.f32.mrf.mxu0
    %v366 = vadd.f32 %v352, %v365
    %367 = vdwg.mxu0
    %v368 = vld [vmem:[%s2 + $0x38] sm:$0xf]
    %v369 = vld [vmem:[%s2 + $0x3c] sm:$0xf]
    %v370 = vld [vmem:[%s2 + $0x40] sm:$0xf]
    %v371 = vpack.c.bf16 %v364, %v364
    %v372 = vpack.c.bf16 %v366, %v366
    %v373 = vunpack.c.l.bf16 %v371
    %v374 = vunpack.c.l.bf16 %v372
    %v375 = vsub.f32 %v364, %v373
    %v376 = vsub.f32 %v366, %v374
    %v377 = vpack.c.bf16 %v376, %v375
    %v381 = vunpack.c.l.b16 %v368
    %v382 = vunpack.c.l.b16 %v369
    %v383 = vunpack.c.l.b16 %v370
    %v384 = vpack.c.b16 %v382, %v381
    %v385 = vpack.c.b16 %v383, %v383
    %v388 = vsel %vm38, %v377, 0
    %v391 = vsel %vm42, %v385, 0
    %393 = vmatpush.bf16.msra.mxu0 0
    %394 = vmatpush.bf16.msra.mxu0 0
    %395 = vmatpush.bf16.msra.mxu0 0
    %396 = vmatpush.bf16.msra.mxu0 0
    %397 = vmatpush.bf16.msra.mxu0 0
    %398 = vmatpush.bf16.msra.mxu0 0
    %399 = vmatpush.bf16.msra.mxu0 %v391
    %400 = vmatpush.bf16.msra.mxu0 %v384
    %401 = vmatmul.bf16.gmra.mxu0 %v388
    %v402 = vpop.f32.mrf.mxu0
    %v403 = vadd.f32 0.0, %v402
    %v404 = vpop.f32.mrf.mxu0
    %v405 = vadd.f32 0.0, %v404
    %406 = vdwg.mxu0
    %v409 = vunpack.c.l.b16 %v371
    %v410 = vunpack.c.l.b16 %v372
    %v411 = vpack.c.b16 %v410, %v409
    %v413 = vsel %vm38, %v411, 0
    %415 = vmatpush.bf16.msra.mxu0 0
    %416 = vmatpush.bf16.msra.mxu0 0
    %417 = vmatpush.bf16.msra.mxu0 0
    %418 = vmatpush.bf16.msra.mxu0 0
    %419 = vmatpush.bf16.msra.mxu0 0
    %420 = vmatpush.bf16.msra.mxu0 0
    %421 = vmatpush.bf16.msra.mxu0 %v391
    %422 = vmatpush.bf16.msra.mxu0 %v384
    %423 = vmatmul.bf16.gmra.mxu0 %v413
    %v424 = vpop.f32.mrf.mxu0
    %v425 = vadd.f32 %v403, %v424
    %v426 = vpop.f32.mrf.mxu0
    %v427 = vadd.f32 %v405, %v426
    %428 = vdwg.mxu0
    %v429 = vmul.f32 %v364, %v364
    %v430 = vmul.f32 %v366, %v366
    %v431 = vpack.c.bf16 %v429, %v429
    %v432 = vpack.c.bf16 %v430, %v430
    %v433 = vunpack.c.l.bf16 %v431
    %v434 = vunpack.c.l.bf16 %v432
    %v435 = vsub.f32 %v429, %v433
    %v436 = vsub.f32 %v430, %v434
    %v437 = vpack.c.bf16 %v436, %v435
    %v439 = vsel %vm38, %v437, 0
    %441 = vmatpush.bf16.msra.mxu0 0
    %442 = vmatpush.bf16.msra.mxu0 0
    %443 = vmatpush.bf16.msra.mxu0 0
    %444 = vmatpush.bf16.msra.mxu0 0
    %445 = vmatpush.bf16.msra.mxu0 0
    %446 = vmatpush.bf16.msra.mxu0 0
    %447 = vmatpush.bf16.msra.mxu0 %v391
    %448 = vmatpush.bf16.msra.mxu0 %v384
    %449 = vmatmul.bf16.gmra.mxu0 %v439
    %v450 = vpop.f32.mrf.mxu0
    %v451 = vadd.f32 0.0, %v450
    %v452 = vpop.f32.mrf.mxu0
    %v453 = vadd.f32 0.0, %v452
    %454 = vdwg.mxu0
    %v457 = vunpack.c.l.b16 %v431
    %v458 = vunpack.c.l.b16 %v432
    %v459 = vpack.c.b16 %v458, %v457
    %v461 = vsel %vm38, %v459, 0
    %463 = vmatpush.bf16.msra.mxu0 0
    %464 = vmatpush.bf16.msra.mxu0 0
    %465 = vmatpush.bf16.msra.mxu0 0
    %466 = vmatpush.bf16.msra.mxu0 0
    %467 = vmatpush.bf16.msra.mxu0 0
    %468 = vmatpush.bf16.msra.mxu0 0
    %469 = vmatpush.bf16.msra.mxu0 %v391
    %470 = vmatpush.bf16.msra.mxu0 %v384
    %471 = vmatmul.bf16.gmra.mxu0 %v461
    %v472 = vpop.f32.mrf.mxu0
    %v473 = vadd.f32 %v451, %v472
    %v474 = vpop.f32.mrf.mxu0
    %v475 = vadd.f32 %v453, %v474
    %476 = vdwg.mxu0
    %v477 = vsel %vm38, %v425, 0.0
    %vm478 = vcmask 191488
    %v479 = vsel %vm478, %v427, 0.0
    %v480 = vadd.f32 %v477, %v479
    %v481 = vrot.slane %v480, 4
    %v482 = vadd.f32 %v480, %v481
    %v483 = vrot.slane %v482, 2
    %v484 = vadd.f32 %v482, %v483
    %v485 = vrot.slane %v484, 1
    %v486 = vadd.f32 %v484, %v485
    %v487 = vmul.f32 %v486, 0.013888889
    %v488 = vsel %vm38, %v473, 0.0
    %v489 = vsel %vm478, %v475, 0.0
    %v490 = vadd.f32 %v488, %v489
    %v491 = vrot.slane %v490, 4
    %v492 = vadd.f32 %v490, %v491
    %v493 = vrot.slane %v492, 2
    %v494 = vadd.f32 %v492, %v493
    %v495 = vrot.slane %v494, 1
    %v496 = vadd.f32 %v494, %v495
    %v497 = vmul.f32 %v496, 0.013888889
    %v498 = vmul.f32 %v487, %v487
    %v499 = vsub.f32 %v497, %v498
    %v500 = vmax.f32 %v499, 0.0
    %v501 = vsub.f32 %v364, %v487
    %v502 = vsub.f32 %v366, %v487
    %v503 = vadd.f32 %v500, 1e-05
    %v504 = vrsqrt.pop %v503
    %v505 = vmul.f32 %v504, %v503
    %v506 = vmul.f32 %v505, %v504
    %v507 = vmul.f32 0.5, %v506
    %v508 = vsub.f32 1.5, %v507
    %v509 = vmul.f32 %v504, %v508
    %vm510 = vweird.f32 %v503
    %vm511 = vweird.f32 %v504
    %vm512 = vmor %vm510, %vm511
    %v513 = vsel %vm512, %v504, %v509
    %v514 = vmul.f32 %v501, %v513
    %v515 = vmul.f32 %v502, %v513
    %v516 = vmax.f32 %v514, 0.0
    %v517 = vmax.f32 %v515, 0.0
    %v518 = vpack.c.bf16 %v517, %v516
    %v519 = vld [vmem:[%s3 + $0x28] sm:$0x3]
    %vm520 = vcmask 97280
    %v522 = vsel %vm520, %v519, 0
    %vm524 = vcmask 1045504
    %v526 = vsel %vm524, %v518, 0
    %528 = vmatpush.bf16.msra.mxu0 0
    %529 = vmatpush.bf16.msra.mxu0 0
    %530 = vmatpush.bf16.msra.mxu0 0
    %531 = vmatpush.bf16.msra.mxu0 0
    %532 = vmatpush.bf16.msra.mxu0 0
    %533 = vmatpush.bf16.msra.mxu0 0
    %534 = vmatpush.bf16.msra.mxu0 0
    %535 = vmatpush.bf16.msra.mxu0 %v526
    %536 = vmatmul.bf16.gmra.mxu0 %v522
    %v537 = vpop.f32.mrf.mxu0
    %v538 = vadd.f32 0.0, %v537
    %v539 = vpop.f32.mrf.mxu0
    %540 = vdwg.mxu0
    %v541 = vld [vmem:[%s3 + $0x30] sm:$0x3]
    %v543 = vsel %vm520, %v541, 0
    %545 = vmatpush.bf16.msra.mxu0 0
    %546 = vmatpush.bf16.msra.mxu0 0
    %547 = vmatpush.bf16.msra.mxu0 0
    %548 = vmatpush.bf16.msra.mxu0 0
    %549 = vmatpush.bf16.msra.mxu0 0
    %550 = vmatpush.bf16.msra.mxu0 0
    %551 = vmatpush.bf16.msra.mxu0 0
    %552 = vmatpush.bf16.msra.mxu0 %v526
    %553 = vmatmul.bf16.gmra.mxu0 %v543
    %v554 = vpop.f32.mrf.mxu0
    %v555 = vadd.f32 0.0, %v554
    %v556 = vpop.f32.mrf.mxu0
    %557 = vdwg.mxu0
    %v558 = vld [vmem:[%s3 + $0x38] sm:$0x3]
    %v560 = vsel %vm520, %v558, 0
    %562 = vmatpush.bf16.msra.mxu0 0
    %563 = vmatpush.bf16.msra.mxu0 0
    %564 = vmatpush.bf16.msra.mxu0 0
    %565 = vmatpush.bf16.msra.mxu0 0
    %566 = vmatpush.bf16.msra.mxu0 0
    %567 = vmatpush.bf16.msra.mxu0 0
    %568 = vmatpush.bf16.msra.mxu0 0
    %569 = vmatpush.bf16.msra.mxu0 %v526
    %570 = vmatmul.bf16.gmra.mxu0 %v560
    %v571 = vpop.f32.mrf.mxu0
    %v572 = vadd.f32 0.0, %v571
    %v573 = vpop.f32.mrf.mxu0
    %574 = vdwg.mxu0
    %576 = vrot.lane.b32.xlu0 %v555, 24
    %v577 = vpop.permute.xlu0 %576
    %580 = vrot.lane.b32.xlu0 %v572, 48
    %v581 = vpop.permute.xlu0 %580
    %v583 = vsel %vm38, %v538, %v577
    %vm584 = vcmask 392192
    %v585 = vsel %vm584, %v583, %v581
    %v586 = vpack.c.bf16 %v585, %v585
    %v587 = vld [vmem:[%s2 + $0xa0] sm:$0xf]
    %v588 = vld [vmem:[%s2 + $0xa4] sm:$0xf]
    %v589 = vld [vmem:[%s2 + $0xa8] sm:$0xf]
    %v590 = vld [vmem:[%s2 + $0xac] sm:$0xf]
    %v591 = vld [vmem:[%s2 + $0xb0] sm:$0xf]
    %v592 = vld [vmem:[%s2 + $0xb4] sm:$0xf]
    %v593 = vld [vmem:[%s2 + $0xb8] sm:$0xf]
    %v594 = vld [vmem:[%s2 + $0xbc] sm:$0xf]
    %v595 = vld [vmem:[%s2 + $0xc0] sm:$0xf]
    %v605 = vunpack.c.l.b16 %v587
    %v606 = vunpack.c.l.b16 %v588
    %v607 = vunpack.c.l.b16 %v589
    %v608 = vunpack.c.l.b16 %v590
    %v609 = vunpack.c.l.b16 %v591
    %v610 = vunpack.c.l.b16 %v592
    %v611 = vunpack.c.l.b16 %v593
    %v612 = vunpack.c.l.b16 %v594
    %v613 = vunpack.c.l.b16 %v595
    %v614 = vpack.c.b16 %v606, %v605
    %v615 = vpack.c.b16 %v608, %v607
    %v616 = vpack.c.b16 %v610, %v609
    %v617 = vpack.c.b16 %v612, %v611
    %v618 = vpack.c.b16 %v613, %v613
    %vm623 = vcmask 588800
    %v625 = vsel %vm623, %v586, 0
    %v628 = vsel %vm42, %v618, 0
    %630 = vmatpush.bf16.msra.mxu0 0
    %631 = vmatpush.bf16.msra.mxu0 0
    %632 = vmatpush.bf16.msra.mxu0 0
    %633 = vmatpush.bf16.msra.mxu0 %v628
    %634 = vmatpush.bf16.msra.mxu0 %v617
    %635 = vmatpush.bf16.msra.mxu0 %v616
    %636 = vmatpush.bf16.msra.mxu0 %v615
    %637 = vmatpush.bf16.msra.mxu0 %v614
    %638 = vmatmul.bf16.gmra.mxu0 %v625
    %v639 = vpop.f32.mrf.mxu0
    %v640 = vadd.f32 0.0, %v639
    %v641 = vpop.f32.mrf.mxu0
    %642 = vdwg.mxu0
    %v643 = vld [vmem:[%s2 + $0x48] sm:$0xf]
    %v644 = vld [vmem:[%s2 + $0x4c] sm:$0xf]
    %v645 = vpack.c.bf16 %v640, %v640
    %v646 = vunpack.c.l.bf16 %v645
    %v647 = vsub.f32 %v640, %v646
    %v648 = vpack.c.bf16 %v647, %v647
    %v651 = vunpack.c.l.b16 %v643
    %v652 = vunpack.c.l.b16 %v644
    %v653 = vpack.c.b16 %v652, %v651
    %vm655 = vcmask 130048
    %v657 = vsel %vm655, %v648, 0
    %659 = vmatpush.bf16.msra.mxu0 0
    %660 = vmatpush.bf16.msra.mxu0 0
    %661 = vmatpush.bf16.msra.mxu0 0
    %662 = vmatpush.bf16.msra.mxu0 0
    %663 = vmatpush.bf16.msra.mxu0 0
    %664 = vmatpush.bf16.msra.mxu0 0
    %665 = vmatpush.bf16.msra.mxu0 0
    %666 = vmatpush.bf16.msra.mxu0 %v653
    %667 = vmatmul.bf16.gmra.mxu0 %v657
    %v668 = vpop.f32.mrf.mxu0
    %v669 = vadd.f32 0.0, %v668
    %v670 = vpop.f32.mrf.mxu0
    %671 = vdwg.mxu0
    %v673 = vsel %vm655, %v645, 0
    %675 = vmatpush.bf16.msra.mxu0 0
    %676 = vmatpush.bf16.msra.mxu0 0
    %677 = vmatpush.bf16.msra.mxu0 0
    %678 = vmatpush.bf16.msra.mxu0 0
    %679 = vmatpush.bf16.msra.mxu0 0
    %680 = vmatpush.bf16.msra.mxu0 0
    %681 = vmatpush.bf16.msra.mxu0 0
    %682 = vmatpush.bf16.msra.mxu0 %v653
    %683 = vmatmul.bf16.gmra.mxu0 %v673
    %v684 = vpop.f32.mrf.mxu0
    %v685 = vadd.f32 %v669, %v684
    %v686 = vpop.f32.mrf.mxu0
    %687 = vdwg.mxu0
    %v688 = vmul.f32 %v640, %v640
    %v689 = vpack.c.bf16 %v688, %v688
    %v690 = vunpack.c.l.bf16 %v689
    %v691 = vsub.f32 %v688, %v690
    %v692 = vpack.c.bf16 %v691, %v691
    %v694 = vsel %vm655, %v692, 0
    %696 = vmatpush.bf16.msra.mxu0 0
    %697 = vmatpush.bf16.msra.mxu0 0
    %698 = vmatpush.bf16.msra.mxu0 0
    %699 = vmatpush.bf16.msra.mxu0 0
    %700 = vmatpush.bf16.msra.mxu0 0
    %701 = vmatpush.bf16.msra.mxu0 0
    %702 = vmatpush.bf16.msra.mxu0 0
    %703 = vmatpush.bf16.msra.mxu0 %v653
    %704 = vmatmul.bf16.gmra.mxu0 %v694
    %v705 = vpop.f32.mrf.mxu0
    %v706 = vadd.f32 0.0, %v705
    %v707 = vpop.f32.mrf.mxu0
    %708 = vdwg.mxu0
    %v710 = vsel %vm655, %v689, 0
    %712 = vmatpush.bf16.msra.mxu0 0
    %713 = vmatpush.bf16.msra.mxu0 0
    %714 = vmatpush.bf16.msra.mxu0 0
    %715 = vmatpush.bf16.msra.mxu0 0
    %716 = vmatpush.bf16.msra.mxu0 0
    %717 = vmatpush.bf16.msra.mxu0 0
    %718 = vmatpush.bf16.msra.mxu0 0
    %719 = vmatpush.bf16.msra.mxu0 %v653
    %720 = vmatmul.bf16.gmra.mxu0 %v710
    %v721 = vpop.f32.mrf.mxu0
    %v722 = vadd.f32 %v706, %v721
    %v723 = vpop.f32.mrf.mxu0
    %724 = vdwg.mxu0
    %vm725 = vcmask 125952
    %v726 = vsel %vm725, %v685, 0.0
    %v727 = vrot.slane %v726, 4
    %v728 = vadd.f32 %v726, %v727
    %v729 = vrot.slane %v728, 2
    %v730 = vadd.f32 %v728, %v729
    %v731 = vrot.slane %v730, 1
    %v732 = vadd.f32 %v730, %v731
    %v733 = vmul.f32 %v732, 0.125
    %v734 = vsel %vm725, %v722, 0.0
    %v735 = vrot.slane %v734, 4
    %v736 = vadd.f32 %v734, %v735
    %v737 = vrot.slane %v736, 2
    %v738 = vadd.f32 %v736, %v737
    %v739 = vrot.slane %v738, 1
    %v740 = vadd.f32 %v738, %v739
    %v741 = vmul.f32 %v740, 0.125
    %v742 = vmul.f32 %v733, %v733
    %v743 = vsub.f32 %v741, %v742
    %v744 = vmax.f32 %v743, 0.0
    %v745 = vsub.f32 %v640, %v733
    %v746 = vadd.f32 %v744, 1e-05
    %v747 = vrsqrt.pop %v746
    %v748 = vmul.f32 %v747, %v746
    %v749 = vmul.f32 %v748, %v747
    %v750 = vmul.f32 0.5, %v749
    %v751 = vsub.f32 1.5, %v750
    %v752 = vmul.f32 %v747, %v751
    %vm753 = vweird.f32 %v746
    %vm754 = vweird.f32 %v747
    %vm755 = vmor %vm753, %vm754
    %v756 = vsel %vm755, %v747, %v752
    %v757 = vmul.f32 %v745, %v756
    %v758 = vmax.f32 %v757, 0.0
    %v759 = vpack.c.bf16 %v758, %v758
    %v760 = vld [vmem:[%s3 + $0x40] sm:$0x1]
    %vm761 = vcmask 31744
    %v763 = vsel %vm761, %v760, 0
    %vm765 = vcmask 1041408
    %v767 = vsel %vm765, %v759, 0
    %769 = vmatpush.bf16.msra.mxu0 0
    %770 = vmatpush.bf16.msra.mxu0 0
    %771 = vmatpush.bf16.msra.mxu0 0
    %772 = vmatpush.bf16.msra.mxu0 0
    %773 = vmatpush.bf16.msra.mxu0 0
    %774 = vmatpush.bf16.msra.mxu0 0
    %775 = vmatpush.bf16.msra.mxu0 0
    %776 = vmatpush.bf16.msra.mxu0 %v767
    %777 = vmatmul.bf16.gmra.mxu0 %v763
    %v778 = vpop.f32.mrf.mxu0
    %v779 = vadd.f32 0.0, %v778
    %v780 = vpop.f32.mrf.mxu0
    %781 = vdwg.mxu0
    %v782 = vld [vmem:[%s3 + $0x48] sm:$0x1]
    %v784 = vsel %vm761, %v782, 0
    %786 = vmatpush.bf16.msra.mxu0 0
    %787 = vmatpush.bf16.msra.mxu0 0
    %788 = vmatpush.bf16.msra.mxu0 0
    %789 = vmatpush.bf16.msra.mxu0 0
    %790 = vmatpush.bf16.msra.mxu0 0
    %791 = vmatpush.bf16.msra.mxu0 0
    %792 = vmatpush.bf16.msra.mxu0 0
    %793 = vmatpush.bf16.msra.mxu0 %v767
    %794 = vmatmul.bf16.gmra.mxu0 %v784
    %v795 = vpop.f32.mrf.mxu0
    %v796 = vadd.f32 0.0, %v795
    %v797 = vpop.f32.mrf.mxu0
    %798 = vdwg.mxu0
    %800 = vrot.lane.b32.xlu0 %v796, 16
    %v801 = vpop.permute.xlu0 %800
    %v803 = vsel %vm655, %v779, %v801
    %v804 = vpack.c.bf16 %v803, %v803
    %v805 = vld [vmem:[%s2 + $0xc8] sm:$0xf]
    %v806 = vld [vmem:[%s2 + $0xcc] sm:$0xf]
    %v807 = vld [vmem:[%s2 + $0xd0] sm:$0xf]
    %v808 = vld [vmem:[%s2 + $0xd4] sm:$0xf]
    %v813 = vunpack.c.l.b16 %v805
    %v814 = vunpack.c.l.b16 %v806
    %v815 = vunpack.c.l.b16 %v807
    %v816 = vunpack.c.l.b16 %v808
    %v817 = vpack.c.b16 %v814, %v813
    %v818 = vpack.c.b16 %v816, %v815
    %v822 = vsel %vm79, %v804, 0
    %824 = vmatpush.bf16.msra.mxu0 0
    %825 = vmatpush.bf16.msra.mxu0 0
    %826 = vmatpush.bf16.msra.mxu0 0
    %827 = vmatpush.bf16.msra.mxu0 0
    %828 = vmatpush.bf16.msra.mxu0 0
    %829 = vmatpush.bf16.msra.mxu0 0
    %830 = vmatpush.bf16.msra.mxu0 %v818
    %831 = vmatpush.bf16.msra.mxu0 %v817
    %832 = vmatmul.bf16.gmra.mxu0 %v822
    %v833 = vpop.f32.mrf.mxu0
    %v834 = vadd.f32 0.0, %v833
    %v835 = vpop.f32.mrf.mxu0
    %836 = vdwg.mxu0
    %vm837 = vcmask 58368
    %v838 = vsel %vm837, %v834, 0.0
    %v839 = vrot.slane %v838, 4
    %v840 = vadd.f32 %v838, %v839
    %v841 = vrot.slane %v840, 2
    %v842 = vadd.f32 %v840, %v841
    %v843 = vrot.slane %v842, 1
    %v844 = vadd.f32 %v842, %v843
    %v845 = vrcp.pop 2.0
    %v846 = vmul.f32 2.0, %v845
    %v847 = vsub.f32 1.0, %v846
    %v848 = vmul.f32 %v845, %v847
    %v849 = vadd.f32 %v845, %v848
    %vm850 = vweird.f32 %v845
    %v851 = vsel %vm850, %v845, %v849
    %v852 = vmul.f32 %v844, %v851
    %v853 = vsub.f32 %v834, %v852
    %v854 = vmul.f32 %v853, %v853
    %v855 = vsel %vm837, %v854, 0.0
    %v856 = vrot.slane %v855, 4
    %v857 = vadd.f32 %v855, %v856
    %v858 = vrot.slane %v857, 2
    %v859 = vadd.f32 %v857, %v858
    %v860 = vrot.slane %v859, 1
    %v861 = vadd.f32 %v859, %v860
    %v862 = vmul.f32 %v861, %v851
    %v863 = vadd.f32 %v862, 1e-05
    %v864 = vrsqrt.pop %v863
    %v865 = vmul.f32 %v864, %v863
    %v866 = vmul.f32 %v865, %v864
    %v867 = vmul.f32 0.5, %v866
    %v868 = vsub.f32 1.5, %v867
    %v869 = vmul.f32 %v864, %v868
    %vm870 = vweird.f32 %v863
    %vm871 = vweird.f32 %v864
    %vm872 = vmor %vm870, %vm871
    %v873 = vsel %vm872, %v864, %v869
    %v874 = vmul.f32 %v853, %v873
    %v875 = vmax.f32 %v874, 0.0
    %v876 = vpack.c.bf16 %v96, %v96
    %v877 = vld [vmem:[%s2 + $0x20] sm:$0xf]
    %v878 = vld [vmem:[%s2 + $0x24] sm:$0xf]
    %v879 = vld [vmem:[%s2 + $0x28] sm:$0xf]
    %v880 = vld [vmem:[%s2 + $0x2c] sm:$0xf]
    %v881 = vpack.c.bf16 %v875, %v875
    %v882 = vld [vmem:[%s2 + $0x30] sm:$0xf]
    %vm883 = vcmask 64512
    %v885 = vsel %vm883, %v881, 0
    %v888 = vsel %vm42, %v882, 0
    %890 = vmatpush.bf16.msra.mxu0 0
    %891 = vmatpush.bf16.msra.mxu0 0
    %892 = vmatpush.bf16.msra.mxu0 0
    %893 = vmatpush.bf16.msra.mxu0 0
    %894 = vmatpush.bf16.msra.mxu0 0
    %895 = vmatpush.bf16.msra.mxu0 0
    %896 = vmatpush.bf16.msra.mxu0 0
    %897 = vmatpush.bf16.msra.mxu0 %v888
    %898 = vmatmul.bf16.gmra.mxu0 %v885
    %v899 = vpop.f32.mrf.mxu0
    %v900 = vadd.f32 0.0, %v899
    %v901 = vpop.f32.mrf.mxu0
    %902 = vdwg.mxu0
    %v907 = vunpack.c.l.b16 %v877
    %v908 = vunpack.c.l.b16 %v878
    %v909 = vunpack.c.l.b16 %v879
    %v910 = vunpack.c.l.b16 %v880
    %v911 = vpack.c.b16 %v908, %v907
    %v912 = vpack.c.b16 %v910, %v909
    %v916 = vsel %vm79, %v876, 0
    %918 = vmatpush.bf16.msra.mxu0 0
    %919 = vmatpush.bf16.msra.mxu0 0
    %920 = vmatpush.bf16.msra.mxu0 0
    %921 = vmatpush.bf16.msra.mxu0 0
    %922 = vmatpush.bf16.msra.mxu0 0
    %923 = vmatpush.bf16.msra.mxu0 0
    %924 = vmatpush.bf16.msra.mxu0 %v912
    %925 = vmatpush.bf16.msra.mxu0 %v911
    %926 = vmatmul.bf16.gmra.mxu0 %v916
    %v927 = vpop.f32.mrf.mxu0
    %v928 = vadd.f32 %v900, %v927
    %v929 = vpop.f32.mrf.mxu0
    %930 = vdwg.mxu0
    %v931 = vld [vmem:[%s4 + $0x10] sm:$0x1]
    %v932 = vperm.slane %v931, 0
    %v933 = vadd.f32 %v928, %v932
    %934 = vst.msk [vmem:[#allocation2] sm:$0x3] %vm837, %v933
    // Predicated region
    $region22: #{dqn_forward.1} parent=1 // pred_check
      _
    $region23: #{dqn_forward.1} parent=1 // pred_check_branch
      %936 = sbr.rel (0) target = $region25
    $region24: #{dqn_forward.1} parent=1 // pred_region
      %938 = vsyncadd [#allocation3], 0
      %s940 = sshll.u32 [#allocation2], 4
      %s941 = int_to_ptr.vmem [resolvable:$true] %s940
      %s942 = sshll.u32 %s5, 4
      %s943 = int_to_ptr.hbm [resolvable:$true] %s942
      %945 = dma.vmem_to_hbm [thread:$0]  %s941, 32, %s943, [#allocation3]
    $region25: #{dqn_forward.1} parent=1 // pred_fallthru
      _
    // Predicated region
    $region26: #{dqn_forward.1} parent=1 // pred_check
      _
    $region27: #{dqn_forward.1} parent=1 // pred_check_branch
      %947 = sbr.rel (0) target = $region29
    $region28: #{dqn_forward.1} parent=1 // pred_region
      %949 = dma.done [#allocation3], 32
    $region29: #{dqn_forward.1} parent=1 // pred_fallthru
      _
    %950 = vsyncpa [#allocation3], 1

</llo_original>
